<compile_context>
chip_gen: v7x
topology: tpu7x:2x2x1
jax: 0.10.0
libtpu: 0.0.40
codegen_flags: <defaults>
</compile_context>

<pallas_src>
import functools

import jax
import jax.numpy as jnp
from jax.experimental import pallas as pl
from jax.experimental.pallas import tpu as pltpu


def sample_decoder_kernel(x_ref, w1_ref, b1_ref, w2_ref, b2_ref, o_ref):
    # mlp1: x @ W1 + b1, tanh (f32 accumulate + f32 epilogue)
    h = jnp.dot(x_ref[...], w1_ref[...], preferred_element_type=jnp.float32)
    h = jnp.tanh(h + b1_ref[...].astype(jnp.float32))
    # Cast hidden back to the weight dtype for the second MXU pass (bf16 fast
    # path on v6e/v7x when bf16 params are used; no-op for f32 / v5e).
    h = h.astype(w2_ref.dtype)
    # mlp2: h @ W2 + b2, tanh
    out = jnp.dot(h, w2_ref[...], preferred_element_type=jnp.float32)
    out = jnp.tanh(out + b2_ref[...].astype(jnp.float32))
    o_ref[...] = out.astype(o_ref.dtype)


def _round_up(x, m):
    return ((x + m - 1) // m) * m


def _choose_row_tile(B, tm_max, sublane=8):
    """Pick (tm, Bp, n_steps) for the row-tiled grid.

    * tm is a multiple of `sublane` (8 for f32; would be 16 for bf16 rows).
    * For batches large enough to split, emit an EVEN number (>=2) of grid
      steps so both v7x TensorCores get work with "parallel" semantics.
    * tm is capped at tm_max (big tiles amortize the ~0.35 us/step overhead).
    """
    Bp = _round_up(max(B, 1), sublane)
    if Bp <= 2 * sublane:
        return Bp, Bp, 1                      # too small to split usefully
    n_steps = max(2, -(-Bp // tm_max))        # ceil-div, at least 2 steps
    if n_steps % 2:
        n_steps += 1                          # even -> balanced across 2 TCs
    tm = _round_up(-(-Bp // n_steps), sublane)
    Bp = tm * n_steps
    return tm, Bp, n_steps


def prepare_params(w1, b1, w2, b2):
    """ONE-TIME conversion of PyTorch-layout Linear params to kernel layout.

    PyTorch: mlp1.weight (H, F), mlp1.bias (H,), mlp2.weight (F, H), mlp2.bias (F,)
    Kernel:  W1 (F, H), b1 (1, H), W2 (H, F), b2 (1, F)
    Do this once at init, NOT inside the per-call path.
    """
    return (jnp.asarray(w1).T, jnp.asarray(b1).reshape(1, -1),
            jnp.asarray(w2).T, jnp.asarray(b2).reshape(1, -1))


@functools.partial(jax.jit, static_argnames=("tm_max",))
def sample_decoder(x, w1_t, b1, w2_t, b2, *, tm_max=1024):
    """Forward of SampleDecoder: tanh(tanh(x @ W1 + b1) @ W2 + b2).

    x:    (B, F)   activations
    w1_t: (F, H)   mlp1 weight, pre-transposed (see prepare_params)
    b1:   (1, H)
    w2_t: (H, F)   mlp2 weight, pre-transposed
    b2:   (1, F)
    Returns (B, F).
    """
    B, F = x.shape
    H = w1_t.shape[1]
    assert w1_t.shape == (F, H) and w2_t.shape == (H, F)
    assert b1.shape == (1, H) and b2.shape == (1, F)

    tm, Bp, n_steps = _choose_row_tile(B, tm_max)

    # Row-only padding of x, and only when the batch does not divide the row
    # tile (a static no-op for e.g. B=512 below).  No lane padding anywhere.
    xr = x if Bp == B else jnp.pad(x, ((0, Bp - B), (0, 0)))

    # Advisory cost estimate with REAL (unpadded) traffic so XLA can schedule
    # the producer of x / consumer of out around the custom call.
    a_sz = jnp.dtype(x.dtype).itemsize
    w_sz = jnp.dtype(w1_t.dtype).itemsize
    cost = pl.CostEstimate(
        flops=4 * B * F * H,                       # two (B,F)x(F,H)-sized matmuls
        transcendentals=B * (H + F),               # two tanh passes
        bytes_accessed=2 * B * F * a_sz + 2 * F * H * w_sz + (H + F) * w_sz,
    )

    out = pl.pallas_call(
        sample_decoder_kernel,
        out_shape=jax.ShapeDtypeStruct((Bp, F), x.dtype),
        grid=(n_steps,),
        in_specs=[
            pl.BlockSpec((tm, F), lambda i: (i, 0)),   # x: row tiles, true width F
            pl.BlockSpec((F, H), lambda i: (0, 0)),    # W1: resident
            pl.BlockSpec((1, H), lambda i: (0, 0)),    # b1: resident
            pl.BlockSpec((H, F), lambda i: (0, 0)),    # W2: resident
            pl.BlockSpec((1, F), lambda i: (0, 0)),    # b2: resident
        ],
        out_specs=pl.BlockSpec((tm, F), lambda i: (i, 0)),
        compiler_params=pltpu.CompilerParams(
            # Row tiles are independent -> shard grid steps across v7x's 2 TCs.
            dimension_semantics=("parallel",),
            # Tiny tiles; budget well under v7x's 64 MiB physical VMEM.
            vmem_limit_bytes=32 * 1024 * 1024,
        ),
        cost_estimate=cost,
    )(xr, w1_t, b1, w2_t, b2)

    return out if Bp == B else out[:B]


def init_params(key, feature_size, hidden_size, dtype=jnp.float32):
    """Deterministic PyTorch-style Linear init (uniform in +-1/sqrt(fan_in))."""
    k1, k2, k3, k4 = jax.random.split(key, 4)
    bound1 = 1.0 / (feature_size ** 0.5)
    bound2 = 1.0 / (hidden_size ** 0.5)
    # mlp1: Linear(feature_size, hidden_size) -> weight (hidden, feature)
    w1 = jax.random.uniform(k1, (hidden_size, feature_size), dtype, -bound1, bound1)
    b1 = jax.random.uniform(k2, (hidden_size,), dtype, -bound1, bound1)
    # mlp2: Linear(hidden_size, feature_size) -> weight (feature, hidden)
    w2 = jax.random.uniform(k3, (feature_size, hidden_size), dtype, -bound2, bound2)
    b2 = jax.random.uniform(k4, (feature_size,), dtype, -bound2, bound2)
    return w1, b1, w2, b2


if __name__ == "__main__":
    feature_size = 32
    hidden_size = 64
    batch = 512          # -> 2 grid steps of 256 rows (both v7x TCs busy)

    key = jax.random.PRNGKey(0)
    kx, kp = jax.random.split(key)
    x = jax.random.normal(kx, (batch, feature_size), jnp.float32)
    w1, b1, w2, b2 = init_params(kp, feature_size, hidden_size)

    # One-time parameter prep (transpose + bias reshape) -- NOT per call.
    w1_t, b1r, w2_t, b2r = prepare_params(w1, b1, w2, b2)

    out = sample_decoder(x, w1_t, b1r, w2_t, b2r)
    out = jax.block_until_ready(out)

    # Pure-JAX reference check of forward semantics (f32 path -> tight tol).
    ref = jnp.tanh(jnp.tanh(x @ w1.T + b1) @ w2.T + b2)
    assert out.shape == (batch, feature_size)
    assert jnp.allclose(out, ref, atol=1e-5, rtol=1e-5)

    print("KERNEL_OK")
</pallas_src>

<mosaic_0001>
module attributes {stable_mosaic.version = 11 : i64} {
  func.func @sample_decoder_kernel(%arg0: i32, %arg1: memref<256x32xf32, #tpu.memory_space<vmem>>, %arg2: memref<32x64xf32, #tpu.memory_space<vmem>>, %arg3: memref<1x64xf32, #tpu.memory_space<vmem>>, %arg4: memref<64x32xf32, #tpu.memory_space<vmem>>, %arg5: memref<1x32xf32, #tpu.memory_space<vmem>>, %arg6: memref<256x32xf32, #tpu.memory_space<vmem>>) attributes {dimension_semantics = [#tpu.dimension_semantics<parallel>], iteration_bounds = array<i64: 2>, scalar_prefetch = 0 : i64, scratch_operands = 0 : i64, tpu.core_type = #tpu.core_type<tc>, window_params = [{transform_indices = @transform_0, window_bounds = array<i64: 256, 32>}, {pipeline_mode = #tpu.pipeline_mode<synchronous>, transform_indices = @transform_1, window_bounds = array<i64: 32, 64>}, {pipeline_mode = #tpu.pipeline_mode<synchronous>, transform_indices = @transform_2, window_bounds = array<i64: 1, 64>}, {pipeline_mode = #tpu.pipeline_mode<synchronous>, transform_indices = @transform_3, window_bounds = array<i64: 64, 32>}, {pipeline_mode = #tpu.pipeline_mode<synchronous>, transform_indices = @transform_4, window_bounds = array<i64: 1, 32>}, {transform_indices = @transform_5, window_bounds = array<i64: 256, 32>}]} {
    %c0 = arith.constant 0 : index
    %c0_0 = arith.constant 0 : index
    %0 = vector.load %arg1[%c0, %c0_0] : memref<256x32xf32, #tpu.memory_space<vmem>>, vector<256x32xf32>
    %c0_1 = arith.constant 0 : index
    %c0_2 = arith.constant 0 : index
    %1 = vector.load %arg2[%c0_1, %c0_2] : memref<32x64xf32, #tpu.memory_space<vmem>>, vector<32x64xf32>
    %cst = arith.constant dense<0.000000e+00> : vector<256x64xf32>
    %2 = tpu.matmul %0, %1, %cst {dimension_numbers = #tpu.dot_dimension_numbers<[1], [0], [0], [1], [0, 0, 1, 1], [], []>} : vector<256x32xf32>, vector<32x64xf32>, vector<256x64xf32> -> vector<256x64xf32>
    %c0_3 = arith.constant 0 : index
    %c0_4 = arith.constant 0 : index
    %3 = vector.load %arg3[%c0_3, %c0_4] : memref<1x64xf32, #tpu.memory_space<vmem>>, vector<1x64xf32>
    %4 = vector.broadcast %3 : vector<1x64xf32> to vector<256x64xf32>
    %5 = arith.addf %2, %4 : vector<256x64xf32>
    %6 = math.tanh %5 : vector<256x64xf32>
    %c0_5 = arith.constant 0 : index
    %c0_6 = arith.constant 0 : index
    %7 = vector.load %arg4[%c0_5, %c0_6] : memref<64x32xf32, #tpu.memory_space<vmem>>, vector<64x32xf32>
    %cst_7 = arith.constant dense<0.000000e+00> : vector<256x32xf32>
    %8 = tpu.matmul %6, %7, %cst_7 {dimension_numbers = #tpu.dot_dimension_numbers<[1], [0], [0], [1], [0, 0, 1, 1], [], []>} : vector<256x64xf32>, vector<64x32xf32>, vector<256x32xf32> -> vector<256x32xf32>
    %c0_8 = arith.constant 0 : index
    %c0_9 = arith.constant 0 : index
    %9 = vector.load %arg5[%c0_8, %c0_9] : memref<1x32xf32, #tpu.memory_space<vmem>>, vector<1x32xf32>
    %10 = vector.broadcast %9 : vector<1x32xf32> to vector<256x32xf32>
    %11 = arith.addf %8, %10 : vector<256x32xf32>
    %12 = math.tanh %11 : vector<256x32xf32>
    %c0_10 = arith.constant 0 : index
    %c0_11 = arith.constant 0 : index
    %13 = vector.load %arg6[%c0_10, %c0_11] : memref<256x32xf32, #tpu.memory_space<vmem>>, vector<256x32xf32>
    tpu.vector_store %arg6[%c0_10, %c0_11], %12 {strides = array<i32>} : memref<256x32xf32, #tpu.memory_space<vmem>>, vector<256x32xf32>,
    return
  }
  func.func @transform_0(%arg0: i32) -> (i32, i32) {
    %c0_i32 = arith.constant 0 : i32
    %c0_i32_0 = arith.constant 0 : i32
    return %arg0, %c0_i32 : i32, i32
  }
  func.func @transform_1(%arg0: i32) -> (i32, i32) {
    %c0_i32 = arith.constant 0 : i32
    %c0_i32_0 = arith.constant 0 : i32
    %c0_i32_1 = arith.constant 0 : i32
    return %c0_i32, %c0_i32_0 : i32, i32
  }
  func.func @transform_2(%arg0: i32) -> (i32, i32) {
    %c0_i32 = arith.constant 0 : i32
    %c0_i32_0 = arith.constant 0 : i32
    %c0_i32_1 = arith.constant 0 : i32
    return %c0_i32, %c0_i32_0 : i32, i32
  }
  func.func @transform_3(%arg0: i32) -> (i32, i32) {
    %c0_i32 = arith.constant 0 : i32
    %c0_i32_0 = arith.constant 0 : i32
    %c0_i32_1 = arith.constant 0 : i32
    return %c0_i32, %c0_i32_0 : i32, i32
  }
  func.func @transform_4(%arg0: i32) -> (i32, i32) {
    %c0_i32 = arith.constant 0 : i32
    %c0_i32_0 = arith.constant 0 : i32
    %c0_i32_1 = arith.constant 0 : i32
    return %c0_i32, %c0_i32_0 : i32, i32
  }
  func.func @transform_5(%arg0: i32) -> (i32, i32) {
    %c0_i32 = arith.constant 0 : i32
    %c0_i32_0 = arith.constant 0 : i32
    return %arg0, %c0_i32 : i32, i32
  }
}

</mosaic_0001>

<llo_original>
// kernel: sample_decoder.1
$region0: #{sample_decoder.1}
  #allocation0 [shape = 'u32[]', space=smem, size = 0x4, offset = 0x4, fixed_abs, tag = 'smem constant byte address 0x4 - core index']
  #allocation1 [shape = 'u32[144,128]{1,0:T(1,128)}', space=vmem, size = 0x12000, scoped, tag = 'internal scratch']
  %s0 = inlined_call_operand.vmem [shape: f32[512,32], index: 0, kind: input, shape index: {}]
  %s1 = inlined_call_operand.vmem [shape: f32[32,64], index: 1, kind: input, shape index: {}]
  %s2 = inlined_call_operand.vmem [shape: f32[1,64], index: 2, kind: input, shape index: {}]
  %s3 = inlined_call_operand.vmem [shape: f32[64,32], index: 3, kind: input, shape index: {}]
  %s4 = inlined_call_operand.vmem [shape: f32[1,32], index: 4, kind: input, shape index: {}]
  %s5 = inlined_call_operand.vmem [shape: f32[512,32], index: 5, kind: output, shape index: {}]
  %s6 = sld [smem:[#allocation0]]
  $region53: #{sample_decoder.1} parent=0
    _
  %s8 = ssub.s32 1, %s6
  %s9 = scalar_select 0, %s8, %s6
  loop: start=0, step=1, limit=4
  $region2: #{sample_decoder.1} parent=0 // loop_pre_header
    _
  $region3: #{sample_decoder.1} parent=0 // loop_header
    %s11 = sphi 0, %s15
    %p12 = scmp.ge.s32.totalorder %s11, 4
    %s21 = sphi 0, %s23
    %s24 = sphi 0, %s21
    %s25 = sphi 0, %s24
    %s41 = sphi 0, %s25
    %s45 = sphi 0, %s45
    %s47 = sphi 0, %s45
    %s48 = sphi 0, %s47
    %s62 = sphi 0, %s48
    %s66 = sphi 0, %s66
    %s68 = sphi 0, %s66
    %s69 = sphi 0, %s68
    %s83 = sphi 0, %s69
    %s87 = sphi 0, %s87
    %s89 = sphi 0, %s87
    %s90 = sphi 0, %s89
    %s104 = sphi 0, %s90
    %s108 = sphi 0, %s108
    %s110 = sphi 0, %s108
    %s111 = sphi 0, %s110
    %s125 = sphi 0, %s111
    %s131 = sphi 0, %s133
    %s134 = sphi 0, %s131
    %s135 = sphi 0, %s134
    %s151 = sphi 0, %s135
  $region4: #{sample_decoder.1} parent=0 // loop_header_branch
    %14 = sbr.rel (%p12) target = $region8
  $region5: #{sample_decoder.1} parent=0 // loop_body
    %s16 = ssub.s32 %s11, 1
    %s17 = ssub.s32 %s11, 2
    %s18 = sadd.s32 %s11, 1
    %s19 = ssub.s32 %s11, %s18
    %p20 = scmp.eq.s32.totalorder %s19, 0
    %s22 = sadd.s32 %s21, 1
    %s23 = scalar_select %p20, %s21, %s22
    %p26 = pneg %p20
    %p27 = scmp.eq.s32.totalorder %s11, 1
    %p28 = por %p26, %p27
    %p29 = scmp.ne.s32.totalorder %s21, %s24
    %p30 = scmp.eq.s32.totalorder %s11, 0
    %p31 = por %p29, %p30
    %p32 = scmp.ne.s32.totalorder %s21, %s24
    %p33 = scmp.eq.s32.totalorder %s16, 1
    %p34 = por %p32, %p33
    %p35 = scmp.ne.s32.totalorder %s24, %s25
    %p36 = scmp.eq.s32.totalorder %s16, 0
    %p37 = por %p35, %p36
    %p38 = scmp.ne.s32.totalorder %s24, %s25
    %p39 = scmp.eq.s32.totalorder %s17, 1
    %p40 = por %p38, %p39
    %p42 = scmp.ne.s32.totalorder %s25, %s41
    %p43 = scmp.eq.s32.totalorder %s17, 0
    %p44 = por %p42, %p43
    %s46 = sadd.s32 %s45, 1
    %p49 = scmp.eq.s32.totalorder %s11, 1
    %p50 = scmp.ne.s32.totalorder %s45, %s47
    %p51 = scmp.eq.s32.totalorder %s11, 0
    %p52 = por %p50, %p51
    %p53 = scmp.ne.s32.totalorder %s45, %s47
    %p54 = scmp.eq.s32.totalorder %s16, 1
    %p55 = por %p53, %p54
    %p56 = scmp.ne.s32.totalorder %s47, %s48
    %p57 = scmp.eq.s32.totalorder %s16, 0
    %p58 = por %p56, %p57
    %p59 = scmp.ne.s32.totalorder %s47, %s48
    %p60 = scmp.eq.s32.totalorder %s17, 1
    %p61 = por %p59, %p60
    %p63 = scmp.ne.s32.totalorder %s48, %s62
    %p64 = scmp.eq.s32.totalorder %s17, 0
    %p65 = por %p63, %p64
    %s67 = sadd.s32 %s66, 1
    %p70 = scmp.eq.s32.totalorder %s11, 1
    %p71 = scmp.ne.s32.totalorder %s66, %s68
    %p72 = scmp.eq.s32.totalorder %s11, 0
    %p73 = por %p71, %p72
    %p74 = scmp.ne.s32.totalorder %s66, %s68
    %p75 = scmp.eq.s32.totalorder %s16, 1
    %p76 = por %p74, %p75
    %p77 = scmp.ne.s32.totalorder %s68, %s69
    %p78 = scmp.eq.s32.totalorder %s16, 0
    %p79 = por %p77, %p78
    %p80 = scmp.ne.s32.totalorder %s68, %s69
    %p81 = scmp.eq.s32.totalorder %s17, 1
    %p82 = por %p80, %p81
    %p84 = scmp.ne.s32.totalorder %s69, %s83
    %p85 = scmp.eq.s32.totalorder %s17, 0
    %p86 = por %p84, %p85
    %s88 = sadd.s32 %s87, 1
    %p91 = scmp.eq.s32.totalorder %s11, 1
    %p92 = scmp.ne.s32.totalorder %s87, %s89
    %p93 = scmp.eq.s32.totalorder %s11, 0
    %p94 = por %p92, %p93
    %p95 = scmp.ne.s32.totalorder %s87, %s89
    %p96 = scmp.eq.s32.totalorder %s16, 1
    %p97 = por %p95, %p96
    %p98 = scmp.ne.s32.totalorder %s89, %s90
    %p99 = scmp.eq.s32.totalorder %s16, 0
    %p100 = por %p98, %p99
    %p101 = scmp.ne.s32.totalorder %s89, %s90
    %p102 = scmp.eq.s32.totalorder %s17, 1
    %p103 = por %p101, %p102
    %p105 = scmp.ne.s32.totalorder %s90, %s104
    %p106 = scmp.eq.s32.totalorder %s17, 0
    %p107 = por %p105, %p106
    %s109 = sadd.s32 %s108, 1
    %p112 = scmp.eq.s32.totalorder %s11, 1
    %p113 = scmp.ne.s32.totalorder %s108, %s110
    %p114 = scmp.eq.s32.totalorder %s11, 0
    %p115 = por %p113, %p114
    %p116 = scmp.ne.s32.totalorder %s108, %s110
    %p117 = scmp.eq.s32.totalorder %s16, 1
    %p118 = por %p116, %p117
    %p119 = scmp.ne.s32.totalorder %s110, %s111
    %p120 = scmp.eq.s32.totalorder %s16, 0
    %p121 = por %p119, %p120
    %p122 = scmp.ne.s32.totalorder %s110, %s111
    %p123 = scmp.eq.s32.totalorder %s17, 1
    %p124 = por %p122, %p123
    %p126 = scmp.ne.s32.totalorder %s111, %s125
    %p127 = scmp.eq.s32.totalorder %s17, 0
    %p128 = por %p126, %p127
    %s129 = ssub.s32 %s11, %s18
    %p130 = scmp.eq.s32.totalorder %s129, 0
    %s132 = sadd.s32 %s131, 1
    %s133 = scalar_select %p130, %s131, %s132
    %p136 = pneg %p130
    %p137 = scmp.eq.s32.totalorder %s11, 1
    %p138 = por %p136, %p137
    %p139 = scmp.ne.s32.totalorder %s131, %s134
    %p140 = scmp.eq.s32.totalorder %s11, 0
    %p141 = por %p139, %p140
    %p142 = scmp.ne.s32.totalorder %s131, %s134
    %p143 = scmp.eq.s32.totalorder %s16, 1
    %p144 = por %p142, %p143
    %p145 = scmp.ne.s32.totalorder %s134, %s135
    %p146 = scmp.eq.s32.totalorder %s16, 0
    %p147 = por %p145, %p146
    %p148 = scmp.ne.s32.totalorder %s134, %s135
    %p149 = scmp.eq.s32.totalorder %s17, 1
    %p150 = por %p148, %p149
    %p152 = scmp.ne.s32.totalorder %s135, %s151
    %p153 = scmp.eq.s32.totalorder %s17, 0
    %p154 = por %p152, %p153
    %p155 = scmp.le.s32.totalorder 1, %s11
    %p156 = scmp.lt.s32.totalorder %s11, 3
    %p157 = pnand %p155, %p156
    %p158 = pneg %p157
    // Predicated region
    $region9: #{sample_decoder.1} parent=5 // pred_check
      _
    $region10: #{sample_decoder.1} parent=5 // pred_check_branch
      %160 = sbr.rel (%p157) target = $region12
    $region11: #{sample_decoder.1} parent=5 // pred_region
      %s161 = ssub.s32 %s11, 1
      // Predicated region
      $region13: #{sample_decoder.1} parent=11 // pred_check
        %p162 = pneg %p58
      $region14: #{sample_decoder.1} parent=11 // pred_check_branch
        %164 = sbr.rel (%p162) target = $region16
      $region15: #{sample_decoder.1} parent=11 // pred_region
        _
      $region16: #{sample_decoder.1} parent=11 // pred_fallthru
        _
      // Predicated region
      $region17: #{sample_decoder.1} parent=11 // pred_check
        %p165 = pneg %p79
      $region18: #{sample_decoder.1} parent=11 // pred_check_branch
        %167 = sbr.rel (%p165) target = $region20
      $region19: #{sample_decoder.1} parent=11 // pred_region
        _
      $region20: #{sample_decoder.1} parent=11 // pred_fallthru
        _
      // Predicated region
      $region21: #{sample_decoder.1} parent=11 // pred_check
        %p168 = pneg %p100
      $region22: #{sample_decoder.1} parent=11 // pred_check_branch
        %170 = sbr.rel (%p168) target = $region24
      $region23: #{sample_decoder.1} parent=11 // pred_region
        _
      $region24: #{sample_decoder.1} parent=11 // pred_fallthru
        _
      // Predicated region
      $region25: #{sample_decoder.1} parent=11 // pred_check
        %p171 = pneg %p121
      $region26: #{sample_decoder.1} parent=11 // pred_check_branch
        %173 = sbr.rel (%p171) target = $region28
      $region27: #{sample_decoder.1} parent=11 // pred_region
        _
      $region28: #{sample_decoder.1} parent=11 // pred_fallthru
        _
    $region12: #{sample_decoder.1} parent=5 // pred_fallthru
      _
    %p174 = scmp.lt.s32.totalorder %s11, 2
    // Predicated region
    $region29: #{sample_decoder.1} parent=5 // pred_check
      %p175 = pneg %p174
    $region30: #{sample_decoder.1} parent=5 // pred_check_branch
      %177 = sbr.rel (%p175) target = $region32
    $region31: #{sample_decoder.1} parent=5 // pred_region
      // Predicated region
      $region33: #{sample_decoder.1} parent=31 // pred_check
        %p178 = pneg %p31
      $region34: #{sample_decoder.1} parent=31 // pred_check_branch
        %180 = sbr.rel (%p178) target = $region36
      $region35: #{sample_decoder.1} parent=31 // pred_region
        %s181 = smul.u32 32, %s11
        %p182 = scmp.lt.s32.totalorder %s181, 63
        %s183 = scalar_select %p182, %s181, 63
        %s184 = smul.addr %s183, 8
        %s185 = scalar_lea.vmem %s0, %s184
        %s186 = smul.u32 32, %s11
      $region36: #{sample_decoder.1} parent=31 // pred_fallthru
        _
    $region32: #{sample_decoder.1} parent=5 // pred_fallthru
      _
    %p187 = scmp.le.s32.totalorder 1, %s11
    %p188 = scmp.lt.s32.totalorder %s11, 3
    %p189 = pnand %p187, %p188
    %p190 = pneg %p189
    // Predicated region
    $region37: #{sample_decoder.1} parent=5 // pred_check
      _
    $region38: #{sample_decoder.1} parent=5 // pred_check_branch
      %192 = sbr.rel (%p189) target = $region40
    $region39: #{sample_decoder.1} parent=5 // pred_region
      %s193 = ssub.s32 %s11, 1
      %s194 = smul.u32 32, %s16
      %p195 = scmp.lt.s32.totalorder %s194, 63
      %s196 = scalar_select %p195, %s194, 63
      %s197 = smul.addr %s196, 8
      %s198 = scalar_lea.vmem %s0, %s197
      %p199 = pneg %p37
      %p200 = pneg %p34
      %p201 = pneg %p58
      %p202 = pneg %p55
      %p203 = pneg %p79
      %p204 = pneg %p76
      %p205 = pneg %p100
      %p206 = pneg %p97
      %p207 = pneg %p121
      %p208 = pneg %p118
      %p209 = pneg %p147
      %p210 = pneg %p144
      %s211 = smul.u32 32, %s16
      %p212 = scmp.lt.s32.totalorder %s211, 63
      %s213 = scalar_select %p212, %s211, 63
      %s214 = smul.addr %s213, 8
      %s215 = scalar_lea.vmem %s5, %s214
      %s216 = smul.u32 32, %s16
      %p217 = scmp.lt.s32.totalorder %s216, 63
      %s218 = scalar_select %p217, %s216, 63
      %s219 = smul.addr %s218, 8
      %s220 = scalar_lea.vmem %s0, %s219
      %s221 = smul.u32 32, %s16
      %s222 = smul.u32 32, %s16
      %p223 = scmp.lt.s32.totalorder %s222, 63
      %s224 = scalar_select %p223, %s222, 63
      %s225 = smul.addr %s224, 8
      %s226 = scalar_lea.vmem %s5, %s225
      %s227 = smul.u32 32, %s16
      %v228 = vld [vmem:[%s220] sm:$0xff]
      %v229 = vld [vmem:[%s220 + $0x8] sm:$0xff]
      %v230 = vld [vmem:[%s220 + $0x10] sm:$0xff]
      %v231 = vld [vmem:[%s220 + $0x18] sm:$0xff]
      %v232 = vld [vmem:[%s220 + $0x20] sm:$0xff]
      %v233 = vld [vmem:[%s220 + $0x28] sm:$0xff]
      %v234 = vld [vmem:[%s220 + $0x30] sm:$0xff]
      %v235 = vld [vmem:[%s220 + $0x38] sm:$0xff]
      %v236 = vld [vmem:[%s220 + $0x40] sm:$0xff]
      %v237 = vld [vmem:[%s220 + $0x48] sm:$0xff]
      %v238 = vld [vmem:[%s220 + $0x50] sm:$0xff]
      %v239 = vld [vmem:[%s220 + $0x58] sm:$0xff]
      %v240 = vld [vmem:[%s220 + $0x60] sm:$0xff]
      %v241 = vld [vmem:[%s220 + $0x68] sm:$0xff]
      %v242 = vld [vmem:[%s220 + $0x70] sm:$0xff]
      %v243 = vld [vmem:[%s220 + $0x78] sm:$0xff]
      %v244 = vld [vmem:[%s220 + $0x80] sm:$0xff]
      %v245 = vld [vmem:[%s220 + $0x88] sm:$0xff]
      %v246 = vld [vmem:[%s220 + $0x90] sm:$0xff]
      %v247 = vld [vmem:[%s220 + $0x98] sm:$0xff]
      %v248 = vld [vmem:[%s220 + $0xa0] sm:$0xff]
      %v249 = vld [vmem:[%s220 + $0xa8] sm:$0xff]
      %v250 = vld [vmem:[%s220 + $0xb0] sm:$0xff]
      %v251 = vld [vmem:[%s220 + $0xb8] sm:$0xff]
      %v252 = vld [vmem:[%s220 + $0xc0] sm:$0xff]
      %v253 = vld [vmem:[%s220 + $0xc8] sm:$0xff]
      %v254 = vld [vmem:[%s220 + $0xd0] sm:$0xff]
      %v255 = vld [vmem:[%s220 + $0xd8] sm:$0xff]
      %v256 = vld [vmem:[%s220 + $0xe0] sm:$0xff]
      %v257 = vld [vmem:[%s220 + $0xe8] sm:$0xff]
      %v258 = vld [vmem:[%s220 + $0xf0] sm:$0xff]
      %v259 = vld [vmem:[%s220 + $0xf8] sm:$0xff]
      %v260 = vld [vmem:[%s1] sm:$0xff]
      %v261 = vld [vmem:[%s1 + $0x8] sm:$0xff]
      %v262 = vld [vmem:[%s1 + $0x10] sm:$0xff]
      %v263 = vld [vmem:[%s1 + $0x18] sm:$0xff]
      %v264 = vld [vmem:[%s2] sm:$0x1]
      %v266 = vlaneseq
      %v267 = vshrl.u32 %v266, 7
      %v268 = vsub.s32 0, %v267
      %v269 = vrot.slane %v264, %v268
      %vm271 = vcmask 261120
      %v273 = vsel %vm271, %v228, 0
      %v276 = vsel %vm271, %v229, 0
      %v279 = vsel %vm271, %v230, 0
      %v282 = vsel %vm271, %v231, 0
      %v285 = vsel %vm271, %v232, 0
      %v288 = vsel %vm271, %v233, 0
      %v291 = vsel %vm271, %v234, 0
      %v294 = vsel %vm271, %v235, 0
      %v297 = vsel %vm271, %v236, 0
      %v300 = vsel %vm271, %v237, 0
      %v303 = vsel %vm271, %v238, 0
      %v306 = vsel %vm271, %v239, 0
      %v309 = vsel %vm271, %v240, 0
      %v312 = vsel %vm271, %v241, 0
      %v315 = vsel %vm271, %v242, 0
      %v318 = vsel %vm271, %v243, 0
      %v321 = vsel %vm271, %v244, 0
      %v324 = vsel %vm271, %v245, 0
      %v327 = vsel %vm271, %v246, 0
      %v330 = vsel %vm271, %v247, 0
      %v333 = vsel %vm271, %v248, 0
      %v336 = vsel %vm271, %v249, 0
      %v339 = vsel %vm271, %v250, 0
      %v342 = vsel %vm271, %v251, 0
      %v345 = vsel %vm271, %v252, 0
      %v348 = vsel %vm271, %v253, 0
      %v351 = vsel %vm271, %v254, 0
      %v354 = vsel %vm271, %v255, 0
      %v357 = vsel %vm271, %v256, 0
      %v360 = vsel %vm271, %v257, 0
      %v363 = vsel %vm271, %v258, 0
      %v366 = vsel %vm271, %v259, 0
      %368 = vmatprep.subr.mxu0 0.0
      %369 = vmatpush1.msra.mxu0 %v260
      %370 = vmatprep.subr.mxu0 0.0
      %371 = vmatpush1.msra.mxu0 %v261
      %372 = vmatprep.subr.mxu0 0.0
      %373 = vmatpush1.msra.mxu0 %v262
      %374 = vmatprep.subr.mxu0 0.0
      %375 = vmatpush1.msra.mxu0 %v263
      %376 = vmatprep.subr.mxu0 0.0
      %377 = vmatpush1.msra.mxu0 0.0
      %378 = vmatprep.subr.mxu0 0.0
      %379 = vmatpush1.msra.mxu0 0.0
      %380 = vmatprep.subr.mxu0 0.0
      %381 = vmatpush1.msra.mxu0 0.0
      %382 = vmatprep.subr.mxu0 0.0
      %383 = vmatpush1.msra.mxu0 0.0
      %384 = vmatprep.subr.mxu0 0.0
      %385 = vmatpush1.msra.mxu0 0.0
      %386 = vmatprep.subr.mxu0 0.0
      %387 = vmatpush1.msra.mxu0 0.0
      %388 = vmatprep.subr.mxu0 0.0
      %389 = vmatpush1.msra.mxu0 0.0
      %390 = vmatprep.subr.mxu0 0.0
      %391 = vmatpush1.msra.mxu0 0.0
      %392 = vmatprep.subr.mxu0 0.0
      %393 = vmatpush1.msra.mxu0 0.0
      %394 = vmatprep.subr.mxu0 0.0
      %395 = vmatpush1.msra.mxu0 0.0
      %396 = vmatprep.subr.mxu0 0.0
      %397 = vmatpush1.msra.mxu0 0.0
      %398 = vmatprep.subr.mxu0 0.0
      %399 = vmatpush1.msra.mxu0 0.0
      %400 = vmatprep.subr.mxu0 0.0
      %401 = vmatpush1.msra.mxu0 0.0
      %402 = vmatprep.subr.mxu0 0.0
      %403 = vmatpush1.msra.mxu0 0.0
      %404 = vmatprep.subr.mxu0 0.0
      %405 = vmatpush1.msra.mxu0 0.0
      %406 = vmatprep.subr.mxu0 0.0
      %407 = vmatpush1.msra.mxu0 0.0
      %408 = vmatprep.subr.mxu0 0.0
      %409 = vmatpush1.msra.mxu0 0.0
      %410 = vmatprep.subr.mxu0 0.0
      %411 = vmatpush1.msra.mxu0 0.0
      %412 = vmatprep.subr.mxu0 0.0
      %413 = vmatpush1.msra.mxu0 0.0
      %414 = vmatprep.subr.mxu0 0.0
      %415 = vmatpush1.msra.mxu0 0.0
      %416 = vmatprep.subr.mxu0 0.0
      %417 = vmatpush1.msra.mxu0 0.0
      %418 = vmatprep.subr.mxu0 0.0
      %419 = vmatpush1.msra.mxu0 0.0
      %420 = vmatprep.subr.mxu0 0.0
      %421 = vmatpush1.msra.mxu0 0.0
      %422 = vmatprep.subr.mxu0 0.0
      %423 = vmatpush1.msra.mxu0 0.0
      %424 = vmatprep.subr.mxu0 0.0
      %425 = vmatpush1.msra.mxu0 0.0
      %426 = vmatprep.subr.mxu0 0.0
      %427 = vmatpush1.msra.mxu0 0.0
      %428 = vmatprep.subr.mxu0 0.0
      %429 = vmatpush1.msra.mxu0 0.0
      %430 = vmatprep.subr.mxu0 0.0
      %431 = vmatpush1.msra.mxu0 0.0
      %432 = vmatprep.mubr.f32.mxu0 0.0
      %433 = vmatmul.mubr.f32.gmra.mrb[0].mxu0 %v273
      %v434 = vpop.f32.mrb[0].mxu0
      %v435 = vadd.f32 %v269, %v434
      %v436 = vpop.f32.mrb[0].mxu0
      %437 = vmatprep.mubr.f32.mxu0 0.0
      %438 = vmatmul.mubr.f32.gmra.mrb[0].mxu0 %v276
      %v439 = vpop.f32.mrb[0].mxu0
      %v440 = vadd.f32 %v269, %v439
      %v441 = vpop.f32.mrb[0].mxu0
      %442 = vmatprep.mubr.f32.mxu0 0.0
      %443 = vmatmul.mubr.f32.gmra.mrb[0].mxu0 %v279
      %v444 = vpop.f32.mrb[0].mxu0
      %v445 = vadd.f32 %v269, %v444
      %v446 = vpop.f32.mrb[0].mxu0
      %447 = vmatprep.mubr.f32.mxu0 0.0
      %448 = vmatmul.mubr.f32.gmra.mrb[0].mxu0 %v282
      %v449 = vpop.f32.mrb[0].mxu0
      %v450 = vadd.f32 %v269, %v449
      %v451 = vpop.f32.mrb[0].mxu0
      %452 = vmatprep.mubr.f32.mxu0 0.0
      %453 = vmatmul.mubr.f32.gmra.mrb[0].mxu0 %v285
      %v454 = vpop.f32.mrb[0].mxu0
      %v455 = vadd.f32 %v269, %v454
      %v456 = vpop.f32.mrb[0].mxu0
      %457 = vmatprep.mubr.f32.mxu0 0.0
      %458 = vmatmul.mubr.f32.gmra.mrb[0].mxu0 %v288
      %v459 = vpop.f32.mrb[0].mxu0
      %v460 = vadd.f32 %v269, %v459
      %v461 = vpop.f32.mrb[0].mxu0
      %462 = vmatprep.mubr.f32.mxu0 0.0
      %463 = vmatmul.mubr.f32.gmra.mrb[0].mxu0 %v291
      %v464 = vpop.f32.mrb[0].mxu0
      %v465 = vadd.f32 %v269, %v464
      %v466 = vpop.f32.mrb[0].mxu0
      %467 = vmatprep.mubr.f32.mxu0 0.0
      %468 = vmatmul.mubr.f32.gmra.mrb[0].mxu0 %v294
      %v469 = vpop.f32.mrb[0].mxu0
      %v470 = vadd.f32 %v269, %v469
      %v471 = vpop.f32.mrb[0].mxu0
      %472 = vmatprep.mubr.f32.mxu0 0.0
      %473 = vmatmul.mubr.f32.gmra.mrb[0].mxu0 %v297
      %v474 = vpop.f32.mrb[0].mxu0
      %v475 = vadd.f32 %v269, %v474
      %v476 = vpop.f32.mrb[0].mxu0
      %477 = vmatprep.mubr.f32.mxu0 0.0
      %478 = vmatmul.mubr.f32.gmra.mrb[0].mxu0 %v300
      %v479 = vpop.f32.mrb[0].mxu0
      %v480 = vadd.f32 %v269, %v479
      %v481 = vpop.f32.mrb[0].mxu0
      %482 = vmatprep.mubr.f32.mxu0 0.0
      %483 = vmatmul.mubr.f32.gmra.mrb[0].mxu0 %v303
      %v484 = vpop.f32.mrb[0].mxu0
      %v485 = vadd.f32 %v269, %v484
      %v486 = vpop.f32.mrb[0].mxu0
      %487 = vmatprep.mubr.f32.mxu0 0.0
      %488 = vmatmul.mubr.f32.gmra.mrb[0].mxu0 %v306
      %v489 = vpop.f32.mrb[0].mxu0
      %v490 = vadd.f32 %v269, %v489
      %v491 = vpop.f32.mrb[0].mxu0
      %492 = vmatprep.mubr.f32.mxu0 0.0
      %493 = vmatmul.mubr.f32.gmra.mrb[0].mxu0 %v309
      %v494 = vpop.f32.mrb[0].mxu0
      %v495 = vadd.f32 %v269, %v494
      %v496 = vpop.f32.mrb[0].mxu0
      %497 = vmatprep.mubr.f32.mxu0 0.0
      %498 = vmatmul.mubr.f32.gmra.mrb[0].mxu0 %v312
      %v499 = vpop.f32.mrb[0].mxu0
      %v500 = vadd.f32 %v269, %v499
      %v501 = vpop.f32.mrb[0].mxu0
      %502 = vmatprep.mubr.f32.mxu0 0.0
      %503 = vmatmul.mubr.f32.gmra.mrb[0].mxu0 %v315
      %v504 = vpop.f32.mrb[0].mxu0
      %v505 = vadd.f32 %v269, %v504
      %v506 = vpop.f32.mrb[0].mxu0
      %507 = vmatprep.mubr.f32.mxu0 0.0
      %508 = vmatmul.mubr.f32.gmra.mrb[0].mxu0 %v318
      %v509 = vpop.f32.mrb[0].mxu0
      %v510 = vadd.f32 %v269, %v509
      %v511 = vpop.f32.mrb[0].mxu0
      %512 = vmatprep.mubr.f32.mxu0 0.0
      %513 = vmatmul.mubr.f32.gmra.mrb[0].mxu0 %v321
      %v514 = vpop.f32.mrb[0].mxu0
      %v515 = vadd.f32 %v269, %v514
      %v516 = vpop.f32.mrb[0].mxu0
      %517 = vmatprep.mubr.f32.mxu0 0.0
      %518 = vmatmul.mubr.f32.gmra.mrb[0].mxu0 %v324
      %v519 = vpop.f32.mrb[0].mxu0
      %v520 = vadd.f32 %v269, %v519
      %v521 = vpop.f32.mrb[0].mxu0
      %522 = vmatprep.mubr.f32.mxu0 0.0
      %523 = vmatmul.mubr.f32.gmra.mrb[0].mxu0 %v327
      %v524 = vpop.f32.mrb[0].mxu0
      %v525 = vadd.f32 %v269, %v524
      %v526 = vpop.f32.mrb[0].mxu0
      %527 = vmatprep.mubr.f32.mxu0 0.0
      %528 = vmatmul.mubr.f32.gmra.mrb[0].mxu0 %v330
      %v529 = vpop.f32.mrb[0].mxu0
      %v530 = vadd.f32 %v269, %v529
      %v531 = vpop.f32.mrb[0].mxu0
      %532 = vmatprep.mubr.f32.mxu0 0.0
      %533 = vmatmul.mubr.f32.gmra.mrb[0].mxu0 %v333
      %v534 = vpop.f32.mrb[0].mxu0
      %v535 = vadd.f32 %v269, %v534
      %v536 = vpop.f32.mrb[0].mxu0
      %537 = vmatprep.mubr.f32.mxu0 0.0
      %538 = vmatmul.mubr.f32.gmra.mrb[0].mxu0 %v336
      %v539 = vpop.f32.mrb[0].mxu0
      %v540 = vadd.f32 %v269, %v539
      %v541 = vpop.f32.mrb[0].mxu0
      %542 = vmatprep.mubr.f32.mxu0 0.0
      %543 = vmatmul.mubr.f32.gmra.mrb[0].mxu0 %v339
      %v544 = vpop.f32.mrb[0].mxu0
      %v545 = vadd.f32 %v269, %v544
      %v546 = vpop.f32.mrb[0].mxu0
      %547 = vmatprep.mubr.f32.mxu0 0.0
      %548 = vmatmul.mubr.f32.gmra.mrb[0].mxu0 %v342
      %v549 = vpop.f32.mrb[0].mxu0
      %v550 = vadd.f32 %v269, %v549
      %v551 = vpop.f32.mrb[0].mxu0
      %552 = vmatprep.mubr.f32.mxu0 0.0
      %553 = vmatmul.mubr.f32.gmra.mrb[0].mxu0 %v345
      %v554 = vpop.f32.mrb[0].mxu0
      %v555 = vadd.f32 %v269, %v554
      %v556 = vpop.f32.mrb[0].mxu0
      %557 = vmatprep.mubr.f32.mxu0 0.0
      %558 = vmatmul.mubr.f32.gmra.mrb[0].mxu0 %v348
      %v559 = vpop.f32.mrb[0].mxu0
      %v560 = vadd.f32 %v269, %v559
      %v561 = vpop.f32.mrb[0].mxu0
      %562 = vmatprep.mubr.f32.mxu0 0.0
      %563 = vmatmul.mubr.f32.gmra.mrb[0].mxu0 %v351
      %v564 = vpop.f32.mrb[0].mxu0
      %v565 = vadd.f32 %v269, %v564
      %v566 = vpop.f32.mrb[0].mxu0
      %567 = vmatprep.mubr.f32.mxu0 0.0
      %568 = vmatmul.mubr.f32.gmra.mrb[0].mxu0 %v354
      %v569 = vpop.f32.mrb[0].mxu0
      %v570 = vadd.f32 %v269, %v569
      %v571 = vpop.f32.mrb[0].mxu0
      %572 = vmatprep.mubr.f32.mxu0 0.0
      %573 = vmatmul.mubr.f32.gmra.mrb[0].mxu0 %v357
      %v574 = vpop.f32.mrb[0].mxu0
      %v575 = vadd.f32 %v269, %v574
      %v576 = vpop.f32.mrb[0].mxu0
      %577 = vmatprep.mubr.f32.mxu0 0.0
      %578 = vmatmul.mubr.f32.gmra.mrb[0].mxu0 %v360
      %v579 = vpop.f32.mrb[0].mxu0
      %v580 = vadd.f32 %v269, %v579
      %v581 = vpop.f32.mrb[0].mxu0
      %582 = vmatprep.mubr.f32.mxu0 0.0
      %583 = vmatmul.mubr.f32.gmra.mrb[0].mxu0 %v363
      %v584 = vpop.f32.mrb[0].mxu0
      %v585 = vadd.f32 %v269, %v584
      %v586 = vpop.f32.mrb[0].mxu0
      %587 = vmatprep.mubr.f32.mxu0 0.0
      %588 = vmatmul.mubr.f32.gmra.mrb[0].mxu0 %v366
      %v589 = vpop.f32.mrb[0].mxu0
      %v590 = vadd.f32 %v269, %v589
      %v591 = vpop.f32.mrb[0].mxu0
      %592 = vdwg.mxu0
      %v593 = vtanh.pop %v435
      %v594 = vtanh.pop %v440
      %v595 = vtanh.pop %v445
      %v596 = vtanh.pop %v450
      %v597 = vtanh.pop %v455
      %v598 = vtanh.pop %v460
      %v599 = vtanh.pop %v465
      %v600 = vtanh.pop %v470
      %v601 = vtanh.pop %v475
      %v602 = vtanh.pop %v480
      %v603 = vtanh.pop %v485
      %v604 = vtanh.pop %v490
      %v605 = vtanh.pop %v495
      %v606 = vtanh.pop %v500
      %v607 = vtanh.pop %v505
      %v608 = vtanh.pop %v510
      %v609 = vtanh.pop %v515
      %v610 = vtanh.pop %v520
      %v611 = vtanh.pop %v525
      %v612 = vtanh.pop %v530
      %v613 = vtanh.pop %v535
      %v614 = vtanh.pop %v540
      %v615 = vtanh.pop %v545
      %v616 = vtanh.pop %v550
      %v617 = vtanh.pop %v555
      %v618 = vtanh.pop %v560
      %v619 = vtanh.pop %v565
      %v620 = vtanh.pop %v570
      %v621 = vtanh.pop %v575
      %v622 = vtanh.pop %v580
      %v623 = vtanh.pop %v585
      %v624 = vtanh.pop %v590
      %v625 = vld [vmem:[%s3] sm:$0xff]
      %v626 = vld [vmem:[%s3 + $0x8] sm:$0xff]
      %v627 = vld [vmem:[%s3 + $0x10] sm:$0xff]
      %v628 = vld [vmem:[%s3 + $0x18] sm:$0xff]
      %v629 = vld [vmem:[%s3 + $0x20] sm:$0xff]
      %v630 = vld [vmem:[%s3 + $0x28] sm:$0xff]
      %v631 = vld [vmem:[%s3 + $0x30] sm:$0xff]
      %v632 = vld [vmem:[%s3 + $0x38] sm:$0xff]
      %v633 = vld [vmem:[%s4] sm:$0x1]
      %v635 = vlaneseq
      %v636 = vshrl.u32 %v635, 7
      %v637 = vsub.s32 0, %v636
      %v638 = vrot.slane %v633, %v637
      %vm640 = vcmask 523264
      %v642 = vsel %vm640, %v593, 0
      %v645 = vsel %vm640, %v594, 0
      %v648 = vsel %vm640, %v595, 0
      %v651 = vsel %vm640, %v596, 0
      %v654 = vsel %vm640, %v597, 0
      %v657 = vsel %vm640, %v598, 0
      %v660 = vsel %vm640, %v599, 0
      %v663 = vsel %vm640, %v600, 0
      %v666 = vsel %vm640, %v601, 0
      %v669 = vsel %vm640, %v602, 0
      %v672 = vsel %vm640, %v603, 0
      %v675 = vsel %vm640, %v604, 0
      %v678 = vsel %vm640, %v605, 0
      %v681 = vsel %vm640, %v606, 0
      %v684 = vsel %vm640, %v607, 0
      %v687 = vsel %vm640, %v608, 0
      %v690 = vsel %vm640, %v609, 0
      %v693 = vsel %vm640, %v610, 0
      %v696 = vsel %vm640, %v611, 0
      %v699 = vsel %vm640, %v612, 0
      %v702 = vsel %vm640, %v613, 0
      %v705 = vsel %vm640, %v614, 0
      %v708 = vsel %vm640, %v615, 0
      %v711 = vsel %vm640, %v616, 0
      %v714 = vsel %vm640, %v617, 0
      %v717 = vsel %vm640, %v618, 0
      %v720 = vsel %vm640, %v619, 0
      %v723 = vsel %vm640, %v620, 0
      %v726 = vsel %vm640, %v621, 0
      %v729 = vsel %vm640, %v622, 0
      %v732 = vsel %vm640, %v623, 0
      %v735 = vsel %vm640, %v624, 0
      %737 = vmatprep.subr.mxu0 0.0
      %738 = vmatpush1.msra.mxu0 %v625
      %739 = vmatprep.subr.mxu0 0.0
      %740 = vmatpush1.msra.mxu0 %v626
      %741 = vmatprep.subr.mxu0 0.0
      %742 = vmatpush1.msra.mxu0 %v627
      %743 = vmatprep.subr.mxu0 0.0
      %744 = vmatpush1.msra.mxu0 %v628
      %745 = vmatprep.subr.mxu0 0.0
      %746 = vmatpush1.msra.mxu0 %v629
      %747 = vmatprep.subr.mxu0 0.0
      %748 = vmatpush1.msra.mxu0 %v630
      %749 = vmatprep.subr.mxu0 0.0
      %750 = vmatpush1.msra.mxu0 %v631
      %751 = vmatprep.subr.mxu0 0.0
      %752 = vmatpush1.msra.mxu0 %v632
      %753 = vmatprep.subr.mxu0 0.0
      %754 = vmatpush1.msra.mxu0 0.0
      %755 = vmatprep.subr.mxu0 0.0
      %756 = vmatpush1.msra.mxu0 0.0
      %757 = vmatprep.subr.mxu0 0.0
      %758 = vmatpush1.msra.mxu0 0.0
      %759 = vmatprep.subr.mxu0 0.0
      %760 = vmatpush1.msra.mxu0 0.0
      %761 = vmatprep.subr.mxu0 0.0
      %762 = vmatpush1.msra.mxu0 0.0
      %763 = vmatprep.subr.mxu0 0.0
      %764 = vmatpush1.msra.mxu0 0.0
      %765 = vmatprep.subr.mxu0 0.0
      %766 = vmatpush1.msra.mxu0 0.0
      %767 = vmatprep.subr.mxu0 0.0
      %768 = vmatpush1.msra.mxu0 0.0
      %769 = vmatprep.subr.mxu0 0.0
      %770 = vmatpush1.msra.mxu0 0.0
      %771 = vmatprep.subr.mxu0 0.0
      %772 = vmatpush1.msra.mxu0 0.0
      %773 = vmatprep.subr.mxu0 0.0
      %774 = vmatpush1.msra.mxu0 0.0
      %775 = vmatprep.subr.mxu0 0.0
      %776 = vmatpush1.msra.mxu0 0.0
      %777 = vmatprep.subr.mxu0 0.0
      %778 = vmatpush1.msra.mxu0 0.0
      %779 = vmatprep.subr.mxu0 0.0
      %780 = vmatpush1.msra.mxu0 0.0
      %781 = vmatprep.subr.mxu0 0.0
      %782 = vmatpush1.msra.mxu0 0.0
      %783 = vmatprep.subr.mxu0 0.0
      %784 = vmatpush1.msra.mxu0 0.0
      %785 = vmatprep.subr.mxu0 0.0
      %786 = vmatpush1.msra.mxu0 0.0
      %787 = vmatprep.subr.mxu0 0.0
      %788 = vmatpush1.msra.mxu0 0.0
      %789 = vmatprep.subr.mxu0 0.0
      %790 = vmatpush1.msra.mxu0 0.0
      %791 = vmatprep.subr.mxu0 0.0
      %792 = vmatpush1.msra.mxu0 0.0
      %793 = vmatprep.subr.mxu0 0.0
      %794 = vmatpush1.msra.mxu0 0.0
      %795 = vmatprep.subr.mxu0 0.0
      %796 = vmatpush1.msra.mxu0 0.0
      %797 = vmatprep.subr.mxu0 0.0
      %798 = vmatpush1.msra.mxu0 0.0
      %799 = vmatprep.subr.mxu0 0.0
      %800 = vmatpush1.msra.mxu0 0.0
      %801 = vmatprep.mubr.f32.mxu0 0.0
      %802 = vmatmul.mubr.f32.gmra.mrb[0].mxu0 %v642
      %v803 = vpop.f32.mrb[0].mxu0
      %v804 = vadd.f32 %v638, %v803
      %v805 = vpop.f32.mrb[0].mxu0
      %806 = vmatprep.mubr.f32.mxu0 0.0
      %807 = vmatmul.mubr.f32.gmra.mrb[0].mxu0 %v645
      %v808 = vpop.f32.mrb[0].mxu0
      %v809 = vadd.f32 %v638, %v808
      %v810 = vpop.f32.mrb[0].mxu0
      %811 = vmatprep.mubr.f32.mxu0 0.0
      %812 = vmatmul.mubr.f32.gmra.mrb[0].mxu0 %v648
      %v813 = vpop.f32.mrb[0].mxu0
      %v814 = vadd.f32 %v638, %v813
      %v815 = vpop.f32.mrb[0].mxu0
      %816 = vmatprep.mubr.f32.mxu0 0.0
      %817 = vmatmul.mubr.f32.gmra.mrb[0].mxu0 %v651
      %v818 = vpop.f32.mrb[0].mxu0
      %v819 = vadd.f32 %v638, %v818
      %v820 = vpop.f32.mrb[0].mxu0
      %821 = vmatprep.mubr.f32.mxu0 0.0
      %822 = vmatmul.mubr.f32.gmra.mrb[0].mxu0 %v654
      %v823 = vpop.f32.mrb[0].mxu0
      %v824 = vadd.f32 %v638, %v823
      %v825 = vpop.f32.mrb[0].mxu0
      %826 = vmatprep.mubr.f32.mxu0 0.0
      %827 = vmatmul.mubr.f32.gmra.mrb[0].mxu0 %v657
      %v828 = vpop.f32.mrb[0].mxu0
      %v829 = vadd.f32 %v638, %v828
      %v830 = vpop.f32.mrb[0].mxu0
      %831 = vmatprep.mubr.f32.mxu0 0.0
      %832 = vmatmul.mubr.f32.gmra.mrb[0].mxu0 %v660
      %v833 = vpop.f32.mrb[0].mxu0
      %v834 = vadd.f32 %v638, %v833
      %v835 = vpop.f32.mrb[0].mxu0
      %836 = vmatprep.mubr.f32.mxu0 0.0
      %837 = vmatmul.mubr.f32.gmra.mrb[0].mxu0 %v663
      %v838 = vpop.f32.mrb[0].mxu0
      %v839 = vadd.f32 %v638, %v838
      %v840 = vpop.f32.mrb[0].mxu0
      %841 = vmatprep.mubr.f32.mxu0 0.0
      %842 = vmatmul.mubr.f32.gmra.mrb[0].mxu0 %v666
      %v843 = vpop.f32.mrb[0].mxu0
      %v844 = vadd.f32 %v638, %v843
      %v845 = vpop.f32.mrb[0].mxu0
      %846 = vmatprep.mubr.f32.mxu0 0.0
      %847 = vmatmul.mubr.f32.gmra.mrb[0].mxu0 %v669
      %v848 = vpop.f32.mrb[0].mxu0
      %v849 = vadd.f32 %v638, %v848
      %v850 = vpop.f32.mrb[0].mxu0
      %851 = vmatprep.mubr.f32.mxu0 0.0
      %852 = vmatmul.mubr.f32.gmra.mrb[0].mxu0 %v672
      %v853 = vpop.f32.mrb[0].mxu0
      %v854 = vadd.f32 %v638, %v853
      %v855 = vpop.f32.mrb[0].mxu0
      %856 = vmatprep.mubr.f32.mxu0 0.0
      %857 = vmatmul.mubr.f32.gmra.mrb[0].mxu0 %v675
      %v858 = vpop.f32.mrb[0].mxu0
      %v859 = vadd.f32 %v638, %v858
      %v860 = vpop.f32.mrb[0].mxu0
      %861 = vmatprep.mubr.f32.mxu0 0.0
      %862 = vmatmul.mubr.f32.gmra.mrb[0].mxu0 %v678
      %v863 = vpop.f32.mrb[0].mxu0
      %v864 = vadd.f32 %v638, %v863
      %v865 = vpop.f32.mrb[0].mxu0
      %866 = vmatprep.mubr.f32.mxu0 0.0
      %867 = vmatmul.mubr.f32.gmra.mrb[0].mxu0 %v681
      %v868 = vpop.f32.mrb[0].mxu0
      %v869 = vadd.f32 %v638, %v868
      %v870 = vpop.f32.mrb[0].mxu0
      %871 = vmatprep.mubr.f32.mxu0 0.0
      %872 = vmatmul.mubr.f32.gmra.mrb[0].mxu0 %v684
      %v873 = vpop.f32.mrb[0].mxu0
      %v874 = vadd.f32 %v638, %v873
      %v875 = vpop.f32.mrb[0].mxu0
      %876 = vmatprep.mubr.f32.mxu0 0.0
      %877 = vmatmul.mubr.f32.gmra.mrb[0].mxu0 %v687
      %v878 = vpop.f32.mrb[0].mxu0
      %v879 = vadd.f32 %v638, %v878
      %v880 = vpop.f32.mrb[0].mxu0
      %881 = vmatprep.mubr.f32.mxu0 0.0
      %882 = vmatmul.mubr.f32.gmra.mrb[0].mxu0 %v690
      %v883 = vpop.f32.mrb[0].mxu0
      %v884 = vadd.f32 %v638, %v883
      %v885 = vpop.f32.mrb[0].mxu0
      %886 = vmatprep.mubr.f32.mxu0 0.0
      %887 = vmatmul.mubr.f32.gmra.mrb[0].mxu0 %v693
      %v888 = vpop.f32.mrb[0].mxu0
      %v889 = vadd.f32 %v638, %v888
      %v890 = vpop.f32.mrb[0].mxu0
      %891 = vmatprep.mubr.f32.mxu0 0.0
      %892 = vmatmul.mubr.f32.gmra.mrb[0].mxu0 %v696
      %v893 = vpop.f32.mrb[0].mxu0
      %v894 = vadd.f32 %v638, %v893
      %v895 = vpop.f32.mrb[0].mxu0
      %896 = vmatprep.mubr.f32.mxu0 0.0
      %897 = vmatmul.mubr.f32.gmra.mrb[0].mxu0 %v699
      %v898 = vpop.f32.mrb[0].mxu0
      %v899 = vadd.f32 %v638, %v898
      %v900 = vpop.f32.mrb[0].mxu0
      %901 = vmatprep.mubr.f32.mxu0 0.0
      %902 = vmatmul.mubr.f32.gmra.mrb[0].mxu0 %v702
      %v903 = vpop.f32.mrb[0].mxu0
      %v904 = vadd.f32 %v638, %v903
      %v905 = vpop.f32.mrb[0].mxu0
      %906 = vmatprep.mubr.f32.mxu0 0.0
      %907 = vmatmul.mubr.f32.gmra.mrb[0].mxu0 %v705
      %v908 = vpop.f32.mrb[0].mxu0
      %v909 = vadd.f32 %v638, %v908
      %v910 = vpop.f32.mrb[0].mxu0
      %911 = vmatprep.mubr.f32.mxu0 0.0
      %912 = vmatmul.mubr.f32.gmra.mrb[0].mxu0 %v708
      %v913 = vpop.f32.mrb[0].mxu0
      %v914 = vadd.f32 %v638, %v913
      %v915 = vpop.f32.mrb[0].mxu0
      %916 = vmatprep.mubr.f32.mxu0 0.0
      %917 = vmatmul.mubr.f32.gmra.mrb[0].mxu0 %v711
      %v918 = vpop.f32.mrb[0].mxu0
      %v919 = vadd.f32 %v638, %v918
      %v920 = vpop.f32.mrb[0].mxu0
      %921 = vmatprep.mubr.f32.mxu0 0.0
      %922 = vmatmul.mubr.f32.gmra.mrb[0].mxu0 %v714
      %v923 = vpop.f32.mrb[0].mxu0
      %v924 = vadd.f32 %v638, %v923
      %v925 = vpop.f32.mrb[0].mxu0
      %926 = vmatprep.mubr.f32.mxu0 0.0
      %927 = vmatmul.mubr.f32.gmra.mrb[0].mxu0 %v717
      %v928 = vpop.f32.mrb[0].mxu0
      %v929 = vadd.f32 %v638, %v928
      %v930 = vpop.f32.mrb[0].mxu0
      %931 = vmatprep.mubr.f32.mxu0 0.0
      %932 = vmatmul.mubr.f32.gmra.mrb[0].mxu0 %v720
      %v933 = vpop.f32.mrb[0].mxu0
      %v934 = vadd.f32 %v638, %v933
      %v935 = vpop.f32.mrb[0].mxu0
      %936 = vmatprep.mubr.f32.mxu0 0.0
      %937 = vmatmul.mubr.f32.gmra.mrb[0].mxu0 %v723
      %v938 = vpop.f32.mrb[0].mxu0
      %v939 = vadd.f32 %v638, %v938
      %v940 = vpop.f32.mrb[0].mxu0
      %941 = vmatprep.mubr.f32.mxu0 0.0
      %942 = vmatmul.mubr.f32.gmra.mrb[0].mxu0 %v726
      %v943 = vpop.f32.mrb[0].mxu0
      %v944 = vadd.f32 %v638, %v943
      %v945 = vpop.f32.mrb[0].mxu0
      %946 = vmatprep.mubr.f32.mxu0 0.0
      %947 = vmatmul.mubr.f32.gmra.mrb[0].mxu0 %v729
      %v948 = vpop.f32.mrb[0].mxu0
      %v949 = vadd.f32 %v638, %v948
      %v950 = vpop.f32.mrb[0].mxu0
      %951 = vmatprep.mubr.f32.mxu0 0.0
      %952 = vmatmul.mubr.f32.gmra.mrb[0].mxu0 %v732
      %v953 = vpop.f32.mrb[0].mxu0
      %v954 = vadd.f32 %v638, %v953
      %v955 = vpop.f32.mrb[0].mxu0
      %956 = vmatprep.mubr.f32.mxu0 0.0
      %957 = vmatmul.mubr.f32.gmra.mrb[0].mxu0 %v735
      %v958 = vpop.f32.mrb[0].mxu0
      %v959 = vadd.f32 %v638, %v958
      %v960 = vpop.f32.mrb[0].mxu0
      %961 = vdwg.mxu0
      %v962 = vtanh.pop %v804
      %v963 = vtanh.pop %v809
      %v964 = vtanh.pop %v814
      %v965 = vtanh.pop %v819
      %v966 = vtanh.pop %v824
      %v967 = vtanh.pop %v829
      %v968 = vtanh.pop %v834
      %v969 = vtanh.pop %v839
      %v970 = vtanh.pop %v844
      %v971 = vtanh.pop %v849
      %v972 = vtanh.pop %v854
      %v973 = vtanh.pop %v859
      %v974 = vtanh.pop %v864
      %v975 = vtanh.pop %v869
      %v976 = vtanh.pop %v874
      %v977 = vtanh.pop %v879
      %v978 = vtanh.pop %v884
      %v979 = vtanh.pop %v889
      %v980 = vtanh.pop %v894
      %v981 = vtanh.pop %v899
      %v982 = vtanh.pop %v904
      %v983 = vtanh.pop %v909
      %v984 = vtanh.pop %v914
      %v985 = vtanh.pop %v919
      %v986 = vtanh.pop %v924
      %v987 = vtanh.pop %v929
      %v988 = vtanh.pop %v934
      %v989 = vtanh.pop %v939
      %v990 = vtanh.pop %v944
      %v991 = vtanh.pop %v949
      %v992 = vtanh.pop %v954
      %v993 = vtanh.pop %v959
      %994 = vst.msk [vmem:[%s226] sm:$0xff] %vm271, %v962
      %995 = vst.msk [vmem:[%s226 + $0x8] sm:$0xff] %vm271, %v963
      %996 = vst.msk [vmem:[%s226 + $0x10] sm:$0xff] %vm271, %v964
      %997 = vst.msk [vmem:[%s226 + $0x18] sm:$0xff] %vm271, %v965
      %998 = vst.msk [vmem:[%s226 + $0x20] sm:$0xff] %vm271, %v966
      %999 = vst.msk [vmem:[%s226 + $0x28] sm:$0xff] %vm271, %v967
      %1000 = vst.msk [vmem:[%s226 + $0x30] sm:$0xff] %vm271, %v968
      %1001 = vst.msk [vmem:[%s226 + $0x38] sm:$0xff] %vm271, %v969
      %1002 = vst.msk [vmem:[%s226 + $0x40] sm:$0xff] %vm271, %v970
      %1003 = vst.msk [vmem:[%s226 + $0x48] sm:$0xff] %vm271, %v971
      %1004 = vst.msk [vmem:[%s226 + $0x50] sm:$0xff] %vm271, %v972
      %1005 = vst.msk [vmem:[%s226 + $0x58] sm:$0xff] %vm271, %v973
      %1006 = vst.msk [vmem:[%s226 + $0x60] sm:$0xff] %vm271, %v974
      %1007 = vst.msk [vmem:[%s226 + $0x68] sm:$0xff] %vm271, %v975
      %1008 = vst.msk [vmem:[%s226 + $0x70] sm:$0xff] %vm271, %v976
      %1009 = vst.msk [vmem:[%s226 + $0x78] sm:$0xff] %vm271, %v977
      %1010 = vst.msk [vmem:[%s226 + $0x80] sm:$0xff] %vm271, %v978
      %1011 = vst.msk [vmem:[%s226 + $0x88] sm:$0xff] %vm271, %v979
      %1012 = vst.msk [vmem:[%s226 + $0x90] sm:$0xff] %vm271, %v980
      %1013 = vst.msk [vmem:[%s226 + $0x98] sm:$0xff] %vm271, %v981
      %1014 = vst.msk [vmem:[%s226 + $0xa0] sm:$0xff] %vm271, %v982
      %1015 = vst.msk [vmem:[%s226 + $0xa8] sm:$0xff] %vm271, %v983
      %1016 = vst.msk [vmem:[%s226 + $0xb0] sm:$0xff] %vm271, %v984
      %1017 = vst.msk [vmem:[%s226 + $0xb8] sm:$0xff] %vm271, %v985
      %1018 = vst.msk [vmem:[%s226 + $0xc0] sm:$0xff] %vm271, %v986
      %1019 = vst.msk [vmem:[%s226 + $0xc8] sm:$0xff] %vm271, %v987
      %1020 = vst.msk [vmem:[%s226 + $0xd0] sm:$0xff] %vm271, %v988
      %1021 = vst.msk [vmem:[%s226 + $0xd8] sm:$0xff] %vm271, %v989
      %1022 = vst.msk [vmem:[%s226 + $0xe0] sm:$0xff] %vm271, %v990
      %1023 = vst.msk [vmem:[%s226 + $0xe8] sm:$0xff] %vm271, %v991
      %1024 = vst.msk [vmem:[%s226 + $0xf0] sm:$0xff] %vm271, %v992
      %1025 = vst.msk [vmem:[%s226 + $0xf8] sm:$0xff] %vm271, %v993
      %s1026 = smul.u32 32, %s16
      %p1027 = scmp.lt.s32.totalorder %s1026, 63
      %s1028 = scalar_select %p1027, %s1026, 63
      %s1029 = smul.addr %s1028, 8
      %s1030 = scalar_lea.vmem %s5, %s1029
      // Predicated region
      $region41: #{sample_decoder.1} parent=39 // pred_check
        %p1031 = pneg %p144
      $region42: #{sample_decoder.1} parent=39 // pred_check_branch
        %1033 = sbr.rel (%p1031) target = $region44
      $region43: #{sample_decoder.1} parent=39 // pred_region
        %s1034 = smul.u32 32, %s16
      $region44: #{sample_decoder.1} parent=39 // pred_fallthru
        _
    $region40: #{sample_decoder.1} parent=5 // pred_fallthru
      _
    %p1035 = scmp.le.s32.totalorder 2, %s11
    // Predicated region
    $region45: #{sample_decoder.1} parent=5 // pred_check
      %p1036 = pneg %p1035
    $region46: #{sample_decoder.1} parent=5 // pred_check_branch
      %1038 = sbr.rel (%p1036) target = $region48
    $region47: #{sample_decoder.1} parent=5 // pred_region
      %s1039 = ssub.s32 %s11, 2
      // Predicated region
      $region49: #{sample_decoder.1} parent=47 // pred_check
        %p1040 = pneg %p150
      $region50: #{sample_decoder.1} parent=47 // pred_check_branch
        %1042 = sbr.rel (%p1040) target = $region52
      $region51: #{sample_decoder.1} parent=47 // pred_region
        %s1043 = smul.u32 32, %s17
        %p1044 = scmp.lt.s32.totalorder %s1043, 63
        %s1045 = scalar_select %p1044, %s1043, 63
        %s1046 = smul.addr %s1045, 8
        %s1047 = scalar_lea.vmem %s5, %s1046
      $region52: #{sample_decoder.1} parent=47 // pred_fallthru
        _
    $region48: #{sample_decoder.1} parent=5 // pred_fallthru
      _
  $region6: #{sample_decoder.1} parent=0 // loop_footer
    %s15 = sadd.s32 1, %s11
  $region7: #{sample_decoder.1} parent=0 // loop_footer_branch
    %10 = sbr.rel target = $region3
  $region8: #{sample_decoder.1} parent=0 // loop_exit
    _

</llo_original>
